<compile_context>
chip_gen: v7x
topology: tpu7x:2x2x1
jax: 0.10.0
libtpu: 0.0.40
codegen_flags: <defaults>
</compile_context>

<pallas_src>
import functools
import math

import jax
import jax.numpy as jnp
from jax import lax
from jax.experimental import pallas as pl
from jax.experimental.pallas import tpu as pltpu

_ELL = 0.1                              # narrow-gaussian width
_GAUSS_C = -0.5 / (_ELL * _ELL)         # exp(-0.5*(x/ell)^2) == exp(C * x * x)


def _lbs_block_kernel(pred_ref, gt_ref, e_ref, out_ref, *, true_b, group, padded):
    """One batch tile.

    pred_ref/gt_ref: (br, W) with W = group*J; `group` consecutive samples per
        sublane row, each sample's J joints contiguous on the lane axis.
    e_ref: (W, group) constant block-diagonal ones matrix (per-sample J-sum
        runs as a matmul on the idle MXU).
    out_ref: (8, 128) per-block partials; rows 0..3 = [l1, sparse, reg,
        nonzero] block sums broadcast over lanes, rows 4..7 zero.
    """
    f32 = jnp.float32
    p = pred_ref[...].astype(f32)        # upcast in-kernel (bf16 carry-in OK)
    g = gt_ref[...].astype(f32)
    e = e_ref[...]

    # Element-wise transforms (VPU/EUP), fully lane-dense.
    t_l1 = jnp.abs(p - g)                                 # |pred - gt|
    t_sp = jnp.exp(0.8 * jnp.log(jnp.abs(p) + 1e-12))     # (|p| + eps)^0.8
    t_nz = jnp.exp(_GAUSS_C * (g * g)) - jnp.exp(_GAUSS_C * (p * p))

    # Per-sample J-reductions on the MXU: (br, W) @ (W, group) -> (br, group).
    l1_ps = jnp.dot(t_l1, e, preferred_element_type=f32)
    sp_ps = jnp.dot(t_sp, e, preferred_element_type=f32)
    rg_ps = jnp.abs(1.0 - jnp.dot(p, e, preferred_element_type=f32))
    nz_ps = jnp.abs(jnp.dot(t_nz, e, preferred_element_type=f32))

    if padded:
        # Explicit zero padding in HBM; only the per-sample terms need masking
        # (|1 - 0| = 1 would otherwise leak into reg).  Trace-time gated.
        br = l1_ps.shape[0]
        base = pl.program_id(0) * (br * group)
        r_i = lax.broadcasted_iota(jnp.int32, (br, group), 0)
        s_i = lax.broadcasted_iota(jnp.int32, (br, group), 1)
        valid = ((base + r_i * group + s_i) < true_b).astype(f32)
        l1_ps = l1_ps * valid
        sp_ps = sp_ps * valid
        rg_ps = rg_ps * valid
        nz_ps = nz_ps * valid

    # Assemble the whole (8, 128) output tile and store it once (no masked
    # 1-sublane stores).
    row = lax.broadcasted_iota(jnp.int32, (8, 128), 0)
    tile = jnp.where(row == 0, jnp.sum(l1_ps),
           jnp.where(row == 1, jnp.sum(sp_ps),
           jnp.where(row == 2, jnp.sum(rg_ps),
           jnp.where(row == 3, jnp.sum(nz_ps), 0.0))))
    out_ref[...] = tile


def lbs_loss(pred, gt, *, block_samples=16384):
    """pred, gt: (B, J) LBS skinning weights (any float dtype). Loss dict."""
    B, J = pred.shape
    assert gt.shape == (B, J)

    group = 128 // math.gcd(J, 128)      # samples per lane row (J=24 -> 16)
    W = group * J                        # lane width, multiple of 128
    granule = 8 * group                  # samples per (8, W) sublane tile

    # Tile selection: big tiles to amortize per-step overhead, but >= 2 blocks
    # whenever the batch allows so v7x megacore can split the "parallel" axis.
    block_samples = max(granule, (block_samples // granule) * granule)
    m = pl.cdiv(B, granule)              # granule units needed
    n_blocks = max(2, pl.cdiv(m * granule, block_samples)) if m >= 2 else 1
    blk_units = pl.cdiv(m, n_blocks)
    n_blocks = pl.cdiv(m, blk_units)
    blk = blk_units * granule
    b_pad = n_blocks * blk
    br = blk // group
    padded = (b_pad != B)

    # NOTE: no astype / transpose here.  The reshape below is a free,
    # layout-preserving view; a pad copy happens only for non-aligned B.
    # TODO(synk): producers emitting tile-aligned batches skip the pad copy.
    if padded:
        pad = ((0, b_pad - B), (0, 0))
        pred = jnp.pad(pred, pad)
        gt = jnp.pad(gt, pad)
    pred_v = pred.reshape(b_pad // group, W)
    gt_v = gt.reshape(b_pad // group, W)

    # Constant block-diagonal ones matrix: E[c, s] = 1 iff c // J == s.
    e_mat = jnp.repeat(jnp.eye(group, dtype=jnp.float32), J, axis=0)  # (W, group)

    kernel = functools.partial(_lbs_block_kernel,
                               true_b=B, group=group, padded=padded)
    raw = pl.pallas_call(
        kernel,
        out_shape=jax.ShapeDtypeStruct((n_blocks * 8, 128), jnp.float32),
        grid=(n_blocks,),
        in_specs=[
            pl.BlockSpec((br, W), lambda i: (i, 0)),
            pl.BlockSpec((br, W), lambda i: (i, 0)),
            pl.BlockSpec((W, group), lambda i: (0, 0)),
        ],
        out_specs=pl.BlockSpec((8, 128), lambda i: (i, 0)),
        compiler_params=pltpu.CompilerParams(
            dimension_semantics=("parallel",),
            vmem_limit_bytes=48 * 1024 * 1024),
    )(pred_v, gt_v, e_mat)

    # Tiny finalization: sum the per-block partials.
    per_block = raw.reshape(n_blocks, 8, 128)[:, :4, 0]      # (n_blocks, 4)
    tot = jnp.sum(per_block, axis=0)
    l1 = tot[0] / (B * J)      # nn.L1Loss: mean over all elements
    sparse = tot[1] / B        # .pow(0.8).sum(1).mean()
    reg = tot[2] / B           # L1Loss(ones(B), pred.sum(1))
    nonzero = tot[3] / B       # L1Loss(acnz(pred), acnz(gt))
    loss = l1 * 10.0 + nonzero * 1.0 + reg + sparse
    # TODO(synk): use_kl / use_softmax / huber-loss constructor variants of
    # LBSLoss are not implemented (default-constructor forward path only).
    return {"loss": loss, "l1": l1, "reg": reg, "sparse": sparse,
            "nonzero": nonzero}


def _lbs_loss_ref(pred, gt):
    B, J = pred.shape
    l1 = jnp.mean(jnp.abs(pred - gt))
    sparse = jnp.mean(jnp.sum((jnp.abs(pred) + 1e-12) ** 0.8, axis=1))
    reg = jnp.mean(jnp.abs(1.0 - jnp.sum(pred, axis=1)))
    g = lambda x: jnp.exp(-0.5 * (x / _ELL) ** 2)
    acnz = lambda x: J - jnp.sum(g(x), axis=1)
    nonzero = jnp.mean(jnp.abs(acnz(pred) - acnz(gt)))
    loss = l1 * 10.0 + nonzero + reg + sparse
    return {"loss": loss, "l1": l1, "reg": reg, "sparse": sparse,
            "nonzero": nonzero}


if __name__ == "__main__":
    B, J = 200, 24   # small batch x joints; exercises padding/mask + 2 blocks
    key = jax.random.PRNGKey(0)
    kp, kg = jax.random.split(key)
    pred = jax.nn.softmax(jax.random.normal(kp, (B, J), dtype=jnp.float32), axis=1)
    gt = jax.nn.softmax(4.0 * jax.random.normal(kg, (B, J), dtype=jnp.float32), axis=1)

    # f32 inputs: tight check vs. pure-JAX reference.
    out = jax.jit(lbs_loss)(pred, gt)
    out = jax.tree_util.tree_map(jax.block_until_ready, out)
    ref = _lbs_loss_ref(pred, gt)
    for k in ("loss", "l1", "reg", "sparse", "nonzero"):
        assert jnp.allclose(out[k], ref[k], rtol=1e-5, atol=1e-5), (k, out[k], ref[k])

    # bf16 carry-in (halves HBM traffic on mem-bound v5e/v6e); kernel upcasts
    # to f32 in VMEM, so compare against the reference on the same values.
    pred_h = pred.astype(jnp.bfloat16)
    gt_h = gt.astype(jnp.bfloat16)
    out_h = jax.jit(lbs_loss)(pred_h, gt_h)
    out_h = jax.tree_util.tree_map(jax.block_until_ready, out_h)
    ref_h = _lbs_loss_ref(pred_h.astype(jnp.float32), gt_h.astype(jnp.float32))
    for k in ("loss", "l1", "reg", "sparse", "nonzero"):
        assert jnp.allclose(out_h[k], ref_h[k], rtol=1e-4, atol=1e-5), (k, out_h[k], ref_h[k])

    print("KERNEL_OK")
</pallas_src>

<mosaic_0001>
module attributes {stable_mosaic.version = 11 : i64} {
  func.func @_lbs_block_kernel(%arg0: i32, %arg1: memref<8x384xf32, #tpu.memory_space<vmem>>, %arg2: memref<8x384xf32, #tpu.memory_space<vmem>>, %arg3: memref<384x16xf32, #tpu.memory_space<vmem>>, %arg4: memref<8x128xf32, #tpu.memory_space<vmem>>) attributes {dimension_semantics = [#tpu.dimension_semantics<parallel>], iteration_bounds = array<i64: 2>, scalar_prefetch = 0 : i64, scratch_operands = 0 : i64, tpu.core_type = #tpu.core_type<tc>, window_params = [{transform_indices = @transform_0, window_bounds = array<i64: 8, 384>}, {transform_indices = @transform_1, window_bounds = array<i64: 8, 384>}, {pipeline_mode = #tpu.pipeline_mode<synchronous>, transform_indices = @transform_2, window_bounds = array<i64: 384, 16>}, {transform_indices = @transform_3, window_bounds = array<i64: 8, 128>}]} {
    %c0 = arith.constant 0 : index
    %c0_0 = arith.constant 0 : index
    %0 = vector.load %arg1[%c0, %c0_0] : memref<8x384xf32, #tpu.memory_space<vmem>>, vector<8x384xf32>
    %c0_1 = arith.constant 0 : index
    %c0_2 = arith.constant 0 : index
    %1 = vector.load %arg2[%c0_1, %c0_2] : memref<8x384xf32, #tpu.memory_space<vmem>>, vector<8x384xf32>
    %c0_3 = arith.constant 0 : index
    %c0_4 = arith.constant 0 : index
    %2 = vector.load %arg3[%c0_3, %c0_4] : memref<384x16xf32, #tpu.memory_space<vmem>>, vector<384x16xf32>
    %3 = arith.subf %0, %1 : vector<8x384xf32>
    %4 = math.absf %3 : vector<8x384xf32>
    %5 = math.absf %0 : vector<8x384xf32>
    %cst = arith.constant 9.99999996E-13 : f32
    %6 = vector.broadcast %cst : f32 to vector<8x384xf32>
    %7 = arith.addf %5, %6 : vector<8x384xf32>
    %8 = math.log %7 : vector<8x384xf32>
    %cst_5 = arith.constant 8.000000e-01 : f32
    %9 = vector.broadcast %cst_5 : f32 to vector<8x384xf32>
    %10 = arith.mulf %9, %8 : vector<8x384xf32>
    %11 = math.exp %10 : vector<8x384xf32>
    %12 = arith.mulf %1, %1 : vector<8x384xf32>
    %cst_6 = arith.constant -5.000000e+01 : f32
    %13 = vector.broadcast %cst_6 : f32 to vector<8x384xf32>
    %14 = arith.mulf %13, %12 : vector<8x384xf32>
    %15 = math.exp %14 : vector<8x384xf32>
    %16 = arith.mulf %0, %0 : vector<8x384xf32>
    %cst_7 = arith.constant -5.000000e+01 : f32
    %17 = vector.broadcast %cst_7 : f32 to vector<8x384xf32>
    %18 = arith.mulf %17, %16 : vector<8x384xf32>
    %19 = math.exp %18 : vector<8x384xf32>
    %20 = arith.subf %15, %19 : vector<8x384xf32>
    %cst_8 = arith.constant dense<0.000000e+00> : vector<8x16xf32>
    %21 = tpu.matmul %4, %2, %cst_8 {dimension_numbers = #tpu.dot_dimension_numbers<[1], [0], [0], [1], [0, 0, 1, 1], [], []>} : vector<8x384xf32>, vector<384x16xf32>, vector<8x16xf32> -> vector<8x16xf32>
    %cst_9 = arith.constant dense<0.000000e+00> : vector<8x16xf32>
    %22 = tpu.matmul %11, %2, %cst_9 {dimension_numbers = #tpu.dot_dimension_numbers<[1], [0], [0], [1], [0, 0, 1, 1], [], []>} : vector<8x384xf32>, vector<384x16xf32>, vector<8x16xf32> -> vector<8x16xf32>
    %cst_10 = arith.constant dense<0.000000e+00> : vector<8x16xf32>
    %23 = tpu.matmul %0, %2, %cst_10 {dimension_numbers = #tpu.dot_dimension_numbers<[1], [0], [0], [1], [0, 0, 1, 1], [], []>} : vector<8x384xf32>, vector<384x16xf32>, vector<8x16xf32> -> vector<8x16xf32>
    %cst_11 = arith.constant 1.000000e+00 : f32
    %24 = vector.broadcast %cst_11 : f32 to vector<8x16xf32>
    %25 = arith.subf %24, %23 : vector<8x16xf32>
    %26 = math.absf %25 : vector<8x16xf32>
    %cst_12 = arith.constant dense<0.000000e+00> : vector<8x16xf32>
    %27 = tpu.matmul %20, %2, %cst_12 {dimension_numbers = #tpu.dot_dimension_numbers<[1], [0], [0], [1], [0, 0, 1, 1], [], []>} : vector<8x384xf32>, vector<384x16xf32>, vector<8x16xf32> -> vector<8x16xf32>
    %28 = math.absf %27 : vector<8x16xf32>
    %c128_i32 = arith.constant 128 : i32
    %29 = arith.muli %arg0, %c128_i32 : i32
    %30 = tpu.iota {dimensions = array<i32: 0>} : vector<8x16xi32>
    %31 = tpu.iota {dimensions = array<i32: 1>} : vector<8x16xi32>
    %c16_i32 = arith.constant 16 : i32
    %32 = vector.broadcast %c16_i32 : i32 to vector<8x16xi32>
    %33 = arith.muli %30, %32 : vector<8x16xi32>
    %34 = vector.broadcast %29 : i32 to vector<8x16xi32>
    %35 = arith.addi %34, %33 : vector<8x16xi32>
    %36 = arith.addi %35, %31 : vector<8x16xi32>
    %c200_i32 = arith.constant 200 : i32
    %37 = vector.broadcast %c200_i32 : i32 to vector<8x16xi32>
    %38 = arith.cmpi slt, %36, %37 : vector<8x16xi32>
    %39 = arith.extui %38 : vector<8x16xi1> to vector<8x16xi32>
    %40 = arith.sitofp %39 : vector<8x16xi32> to vector<8x16xf32>
    %41 = arith.mulf %21, %40 : vector<8x16xf32>
    %42 = arith.mulf %22, %40 : vector<8x16xf32>
    %43 = arith.mulf %26, %40 : vector<8x16xf32>
    %44 = arith.mulf %28, %40 : vector<8x16xf32>
    %45 = tpu.iota {dimensions = array<i32: 0>} : vector<8x128xi32>
    %c0_i32 = arith.constant 0 : i32
    %46 = vector.broadcast %c0_i32 : i32 to vector<8x128xi32>
    %47 = arith.cmpi eq, %45, %46 : vector<8x128xi32>
    %48 = vector.shape_cast %41 : vector<8x16xf32> to vector<1x8x16xf32>
    %cst_13 = arith.constant dense<0.000000e+00> : vector<1xf32>
    %49 = vector.multi_reduction <add>, %48, %cst_13 [1, 2] : vector<1x8x16xf32> to vector<1xf32>
    %50 = vector.shape_cast %49 : vector<1xf32> to vector<1x1x1xf32>
    %51 = vector.extract %50[0, 0, 0] : f32 from vector<1x1x1xf32>
    %c1_i32 = arith.constant 1 : i32
    %52 = vector.broadcast %c1_i32 : i32 to vector<8x128xi32>
    %53 = arith.cmpi eq, %45, %52 : vector<8x128xi32>
    %54 = vector.shape_cast %42 : vector<8x16xf32> to vector<1x8x16xf32>
    %cst_14 = arith.constant dense<0.000000e+00> : vector<1xf32>
    %55 = vector.multi_reduction <add>, %54, %cst_14 [1, 2] : vector<1x8x16xf32> to vector<1xf32>
    %56 = vector.shape_cast %55 : vector<1xf32> to vector<1x1x1xf32>
    %57 = vector.extract %56[0, 0, 0] : f32 from vector<1x1x1xf32>
    %c2_i32 = arith.constant 2 : i32
    %58 = vector.broadcast %c2_i32 : i32 to vector<8x128xi32>
    %59 = arith.cmpi eq, %45, %58 : vector<8x128xi32>
    %60 = vector.shape_cast %43 : vector<8x16xf32> to vector<1x8x16xf32>
    %cst_15 = arith.constant dense<0.000000e+00> : vector<1xf32>
    %61 = vector.multi_reduction <add>, %60, %cst_15 [1, 2] : vector<1x8x16xf32> to vector<1xf32>
    %62 = vector.shape_cast %61 : vector<1xf32> to vector<1x1x1xf32>
    %63 = vector.extract %62[0, 0, 0] : f32 from vector<1x1x1xf32>
    %c3_i32 = arith.constant 3 : i32
    %64 = vector.broadcast %c3_i32 : i32 to vector<8x128xi32>
    %65 = arith.cmpi eq, %45, %64 : vector<8x128xi32>
    %66 = vector.shape_cast %44 : vector<8x16xf32> to vector<1x8x16xf32>
    %cst_16 = arith.constant dense<0.000000e+00> : vector<1xf32>
    %67 = vector.multi_reduction <add>, %66, %cst_16 [1, 2] : vector<1x8x16xf32> to vector<1xf32>
    %68 = vector.shape_cast %67 : vector<1xf32> to vector<1x1x1xf32>
    %69 = vector.extract %68[0, 0, 0] : f32 from vector<1x1x1xf32>
    %cst_17 = arith.constant 0.000000e+00 : f32
    %70 = vector.broadcast %69 : f32 to vector<8x128xf32>
    %71 = vector.broadcast %cst_17 : f32 to vector<8x128xf32>
    %72 = arith.select %65, %70, %71 : vector<8x128xi1>, vector<8x128xf32>
    %73 = vector.broadcast %63 : f32 to vector<8x128xf32>
    %74 = arith.select %59, %73, %72 : vector<8x128xi1>, vector<8x128xf32>
    %75 = vector.broadcast %57 : f32 to vector<8x128xf32>
    %76 = arith.select %53, %75, %74 : vector<8x128xi1>, vector<8x128xf32>
    %77 = vector.broadcast %51 : f32 to vector<8x128xf32>
    %78 = arith.select %47, %77, %76 : vector<8x128xi1>, vector<8x128xf32>
    %c0_18 = arith.constant 0 : index
    %c0_19 = arith.constant 0 : index
    %79 = vector.load %arg4[%c0_18, %c0_19] : memref<8x128xf32, #tpu.memory_space<vmem>>, vector<8x128xf32>
    tpu.vector_store %arg4[%c0_18, %c0_19], %78 {strides = array<i32>} : memref<8x128xf32, #tpu.memory_space<vmem>>, vector<8x128xf32>,
    return
  }
  func.func @transform_0(%arg0: i32) -> (i32, i32) {
    %c0_i32 = arith.constant 0 : i32
    %c0_i32_0 = arith.constant 0 : i32
    return %arg0, %c0_i32 : i32, i32
  }
  func.func @transform_1(%arg0: i32) -> (i32, i32) {
    %c0_i32 = arith.constant 0 : i32
    %c0_i32_0 = arith.constant 0 : i32
    return %arg0, %c0_i32 : i32, i32
  }
  func.func @transform_2(%arg0: i32) -> (i32, i32) {
    %c0_i32 = arith.constant 0 : i32
    %c0_i32_0 = arith.constant 0 : i32
    %c0_i32_1 = arith.constant 0 : i32
    return %c0_i32, %c0_i32_0 : i32, i32
  }
  func.func @transform_3(%arg0: i32) -> (i32, i32) {
    %c0_i32 = arith.constant 0 : i32
    %c0_i32_0 = arith.constant 0 : i32
    return %arg0, %c0_i32 : i32, i32
  }
}

</mosaic_0001>

<llo_original>
// kernel: lbs_loss.1
$region0: #{lbs_loss.1}
  #allocation0 [shape = 'u32[]', space=smem, size = 0x4, offset = 0x4, fixed_abs, tag = 'smem constant byte address 0x4 - core index']
  #allocation1 [shape = 'u32[144,128]{1,0:T(1,128)}', space=vmem, size = 0x12000, scoped, tag = 'internal scratch']
  %s0 = inlined_call_operand.vmem [shape: f32[16,384], index: 0, kind: input, shape index: {}]
  %s1 = inlined_call_operand.vmem [shape: f32[16,384], index: 1, kind: input, shape index: {}]
  %s2 = inlined_call_operand.vmem [shape: f32[384,16], index: 2, kind: input, shape index: {}]
  %s3 = inlined_call_operand.vmem [shape: f32[16,128], index: 3, kind: output, shape index: {}]
  %s4 = sld [smem:[#allocation0]]
  $region45: #{lbs_loss.1} parent=0
    _
  %s6 = ssub.s32 1, %s4
  %s7 = scalar_select 0, %s6, %s4
  loop: start=0, step=1, limit=4
  $region2: #{lbs_loss.1} parent=0 // loop_pre_header
    _
  $region3: #{lbs_loss.1} parent=0 // loop_header
    %s9 = sphi 0, %s13
    %p10 = scmp.ge.s32.totalorder %s9, 4
    %s19 = sphi 0, %s21
    %s22 = sphi 0, %s19
    %s23 = sphi 0, %s22
    %s39 = sphi 0, %s23
    %s45 = sphi 0, %s47
    %s48 = sphi 0, %s45
    %s49 = sphi 0, %s48
    %s65 = sphi 0, %s49
    %s69 = sphi 0, %s69
    %s71 = sphi 0, %s69
    %s72 = sphi 0, %s71
    %s86 = sphi 0, %s72
    %s92 = sphi 0, %s94
    %s95 = sphi 0, %s92
    %s96 = sphi 0, %s95
    %s112 = sphi 0, %s96
  $region4: #{lbs_loss.1} parent=0 // loop_header_branch
    %12 = sbr.rel (%p10) target = $region8
  $region5: #{lbs_loss.1} parent=0 // loop_body
    %s14 = ssub.s32 %s9, 1
    %s15 = ssub.s32 %s9, 2
    %s16 = sadd.s32 %s9, 1
    %s17 = ssub.s32 %s9, %s16
    %p18 = scmp.eq.s32.totalorder %s17, 0
    %s20 = sadd.s32 %s19, 1
    %s21 = scalar_select %p18, %s19, %s20
    %p24 = pneg %p18
    %p25 = scmp.eq.s32.totalorder %s9, 1
    %p26 = por %p24, %p25
    %p27 = scmp.ne.s32.totalorder %s19, %s22
    %p28 = scmp.eq.s32.totalorder %s9, 0
    %p29 = por %p27, %p28
    %p30 = scmp.ne.s32.totalorder %s19, %s22
    %p31 = scmp.eq.s32.totalorder %s14, 1
    %p32 = por %p30, %p31
    %p33 = scmp.ne.s32.totalorder %s22, %s23
    %p34 = scmp.eq.s32.totalorder %s14, 0
    %p35 = por %p33, %p34
    %p36 = scmp.ne.s32.totalorder %s22, %s23
    %p37 = scmp.eq.s32.totalorder %s15, 1
    %p38 = por %p36, %p37
    %p40 = scmp.ne.s32.totalorder %s23, %s39
    %p41 = scmp.eq.s32.totalorder %s15, 0
    %p42 = por %p40, %p41
    %s43 = ssub.s32 %s9, %s16
    %p44 = scmp.eq.s32.totalorder %s43, 0
    %s46 = sadd.s32 %s45, 1
    %s47 = scalar_select %p44, %s45, %s46
    %p50 = pneg %p44
    %p51 = scmp.eq.s32.totalorder %s9, 1
    %p52 = por %p50, %p51
    %p53 = scmp.ne.s32.totalorder %s45, %s48
    %p54 = scmp.eq.s32.totalorder %s9, 0
    %p55 = por %p53, %p54
    %p56 = scmp.ne.s32.totalorder %s45, %s48
    %p57 = scmp.eq.s32.totalorder %s14, 1
    %p58 = por %p56, %p57
    %p59 = scmp.ne.s32.totalorder %s48, %s49
    %p60 = scmp.eq.s32.totalorder %s14, 0
    %p61 = por %p59, %p60
    %p62 = scmp.ne.s32.totalorder %s48, %s49
    %p63 = scmp.eq.s32.totalorder %s15, 1
    %p64 = por %p62, %p63
    %p66 = scmp.ne.s32.totalorder %s49, %s65
    %p67 = scmp.eq.s32.totalorder %s15, 0
    %p68 = por %p66, %p67
    %s70 = sadd.s32 %s69, 1
    %p73 = scmp.eq.s32.totalorder %s9, 1
    %p74 = scmp.ne.s32.totalorder %s69, %s71
    %p75 = scmp.eq.s32.totalorder %s9, 0
    %p76 = por %p74, %p75
    %p77 = scmp.ne.s32.totalorder %s69, %s71
    %p78 = scmp.eq.s32.totalorder %s14, 1
    %p79 = por %p77, %p78
    %p80 = scmp.ne.s32.totalorder %s71, %s72
    %p81 = scmp.eq.s32.totalorder %s14, 0
    %p82 = por %p80, %p81
    %p83 = scmp.ne.s32.totalorder %s71, %s72
    %p84 = scmp.eq.s32.totalorder %s15, 1
    %p85 = por %p83, %p84
    %p87 = scmp.ne.s32.totalorder %s72, %s86
    %p88 = scmp.eq.s32.totalorder %s15, 0
    %p89 = por %p87, %p88
    %s90 = ssub.s32 %s9, %s16
    %p91 = scmp.eq.s32.totalorder %s90, 0
    %s93 = sadd.s32 %s92, 1
    %s94 = scalar_select %p91, %s92, %s93
    %p97 = pneg %p91
    %p98 = scmp.eq.s32.totalorder %s9, 1
    %p99 = por %p97, %p98
    %p100 = scmp.ne.s32.totalorder %s92, %s95
    %p101 = scmp.eq.s32.totalorder %s9, 0
    %p102 = por %p100, %p101
    %p103 = scmp.ne.s32.totalorder %s92, %s95
    %p104 = scmp.eq.s32.totalorder %s14, 1
    %p105 = por %p103, %p104
    %p106 = scmp.ne.s32.totalorder %s95, %s96
    %p107 = scmp.eq.s32.totalorder %s14, 0
    %p108 = por %p106, %p107
    %p109 = scmp.ne.s32.totalorder %s95, %s96
    %p110 = scmp.eq.s32.totalorder %s15, 1
    %p111 = por %p109, %p110
    %p113 = scmp.ne.s32.totalorder %s96, %s112
    %p114 = scmp.eq.s32.totalorder %s15, 0
    %p115 = por %p113, %p114
    %p116 = scmp.le.s32.totalorder 1, %s9
    %p117 = scmp.lt.s32.totalorder %s9, 3
    %p118 = pnand %p116, %p117
    %p119 = pneg %p118
    // Predicated region
    $region9: #{lbs_loss.1} parent=5 // pred_check
      _
    $region10: #{lbs_loss.1} parent=5 // pred_check_branch
      %121 = sbr.rel (%p118) target = $region12
    $region11: #{lbs_loss.1} parent=5 // pred_region
      %s122 = ssub.s32 %s9, 1
      // Predicated region
      $region13: #{lbs_loss.1} parent=11 // pred_check
        %p123 = pneg %p82
      $region14: #{lbs_loss.1} parent=11 // pred_check_branch
        %125 = sbr.rel (%p123) target = $region16
      $region15: #{lbs_loss.1} parent=11 // pred_region
        _
      $region16: #{lbs_loss.1} parent=11 // pred_fallthru
        _
    $region12: #{lbs_loss.1} parent=5 // pred_fallthru
      _
    %p126 = scmp.lt.s32.totalorder %s9, 2
    // Predicated region
    $region17: #{lbs_loss.1} parent=5 // pred_check
      %p127 = pneg %p126
    $region18: #{lbs_loss.1} parent=5 // pred_check_branch
      %129 = sbr.rel (%p127) target = $region20
    $region19: #{lbs_loss.1} parent=5 // pred_region
      // Predicated region
      $region21: #{lbs_loss.1} parent=19 // pred_check
        %p130 = pneg %p29
      $region22: #{lbs_loss.1} parent=19 // pred_check_branch
        %132 = sbr.rel (%p130) target = $region24
      $region23: #{lbs_loss.1} parent=19 // pred_region
        %p133 = scmp.lt.s32.totalorder %s9, 1
        %s134 = scalar_select %p133, %s9, 1
        %s135 = smul.addr %s134, 3
        %s136 = smul.addr %s135, 8
        %s137 = scalar_lea.vmem %s0, %s136
      $region24: #{lbs_loss.1} parent=19 // pred_fallthru
        _
      // Predicated region
      $region25: #{lbs_loss.1} parent=19 // pred_check
        %p138 = pneg %p55
      $region26: #{lbs_loss.1} parent=19 // pred_check_branch
        %140 = sbr.rel (%p138) target = $region28
      $region27: #{lbs_loss.1} parent=19 // pred_region
        %p141 = scmp.lt.s32.totalorder %s9, 1
        %s142 = scalar_select %p141, %s9, 1
        %s143 = smul.addr %s142, 3
        %s144 = smul.addr %s143, 8
        %s145 = scalar_lea.vmem %s1, %s144
      $region28: #{lbs_loss.1} parent=19 // pred_fallthru
        _
    $region20: #{lbs_loss.1} parent=5 // pred_fallthru
      _
    %p146 = scmp.le.s32.totalorder 1, %s9
    %p147 = scmp.lt.s32.totalorder %s9, 3
    %p148 = pnand %p146, %p147
    %p149 = pneg %p148
    // Predicated region
    $region29: #{lbs_loss.1} parent=5 // pred_check
      _
    $region30: #{lbs_loss.1} parent=5 // pred_check_branch
      %151 = sbr.rel (%p148) target = $region32
    $region31: #{lbs_loss.1} parent=5 // pred_region
      %s152 = ssub.s32 %s9, 1
      %p153 = scmp.lt.s32.totalorder %s14, 1
      %s154 = scalar_select %p153, %s14, 1
      %s155 = smul.addr %s154, 3
      %s156 = smul.addr %s155, 8
      %s157 = scalar_lea.vmem %s0, %s156
      %p158 = pneg %p35
      %p159 = pneg %p32
      %p160 = scmp.lt.s32.totalorder %s14, 1
      %s161 = scalar_select %p160, %s14, 1
      %s162 = smul.addr %s161, 3
      %s163 = smul.addr %s162, 8
      %s164 = scalar_lea.vmem %s1, %s163
      %p165 = pneg %p61
      %p166 = pneg %p58
      %p167 = pneg %p82
      %p168 = pneg %p79
      %p169 = pneg %p108
      %p170 = pneg %p105
      %p171 = scmp.lt.s32.totalorder %s14, 1
      %s172 = scalar_select %p171, %s14, 1
      %s173 = smul.addr %s172, 8
      %s174 = scalar_lea.vmem %s3, %s173
      %p175 = scmp.lt.s32.totalorder %s14, 1
      %s176 = scalar_select %p175, %s14, 1
      %s177 = smul.addr %s176, 3
      %s178 = smul.addr %s177, 8
      %s179 = scalar_lea.vmem %s0, %s178
      %p180 = scmp.lt.s32.totalorder %s14, 1
      %s181 = scalar_select %p180, %s14, 1
      %s182 = smul.addr %s181, 3
      %s183 = smul.addr %s182, 8
      %s184 = scalar_lea.vmem %s1, %s183
      %p185 = scmp.lt.s32.totalorder %s14, 1
      %s186 = scalar_select %p185, %s14, 1
      %s187 = smul.addr %s186, 8
      %s188 = scalar_lea.vmem %s3, %s187
      %v189 = vld [vmem:[%s179] sm:$0xff]
      %v190 = vld [vmem:[%s179 + $0x8] sm:$0xff]
      %v191 = vld [vmem:[%s179 + $0x10] sm:$0xff]
      %v192 = vld [vmem:[%s184] sm:$0xff]
      %v193 = vld [vmem:[%s184 + $0x8] sm:$0xff]
      %v194 = vld [vmem:[%s184 + $0x10] sm:$0xff]
      %v195 = vld [vmem:[%s2] sm:$0xff]
      %v196 = vld [vmem:[%s2 + $0x8] sm:$0xff]
      %v197 = vld [vmem:[%s2 + $0x10] sm:$0xff]
      %v198 = vld [vmem:[%s2 + $0x18] sm:$0xff]
      %v199 = vld [vmem:[%s2 + $0x20] sm:$0xff]
      %v200 = vld [vmem:[%s2 + $0x28] sm:$0xff]
      %v201 = vld [vmem:[%s2 + $0x30] sm:$0xff]
      %v202 = vld [vmem:[%s2 + $0x38] sm:$0xff]
      %v203 = vld [vmem:[%s2 + $0x40] sm:$0xff]
      %v204 = vld [vmem:[%s2 + $0x48] sm:$0xff]
      %v205 = vld [vmem:[%s2 + $0x50] sm:$0xff]
      %v206 = vld [vmem:[%s2 + $0x58] sm:$0xff]
      %v207 = vld [vmem:[%s2 + $0x60] sm:$0xff]
      %v208 = vld [vmem:[%s2 + $0x68] sm:$0xff]
      %v209 = vld [vmem:[%s2 + $0x70] sm:$0xff]
      %v210 = vld [vmem:[%s2 + $0x78] sm:$0xff]
      %v211 = vld [vmem:[%s2 + $0x80] sm:$0xff]
      %v212 = vld [vmem:[%s2 + $0x88] sm:$0xff]
      %v213 = vld [vmem:[%s2 + $0x90] sm:$0xff]
      %v214 = vld [vmem:[%s2 + $0x98] sm:$0xff]
      %v215 = vld [vmem:[%s2 + $0xa0] sm:$0xff]
      %v216 = vld [vmem:[%s2 + $0xa8] sm:$0xff]
      %v217 = vld [vmem:[%s2 + $0xb0] sm:$0xff]
      %v218 = vld [vmem:[%s2 + $0xb8] sm:$0xff]
      %v219 = vld [vmem:[%s2 + $0xc0] sm:$0xff]
      %v220 = vld [vmem:[%s2 + $0xc8] sm:$0xff]
      %v221 = vld [vmem:[%s2 + $0xd0] sm:$0xff]
      %v222 = vld [vmem:[%s2 + $0xd8] sm:$0xff]
      %v223 = vld [vmem:[%s2 + $0xe0] sm:$0xff]
      %v224 = vld [vmem:[%s2 + $0xe8] sm:$0xff]
      %v225 = vld [vmem:[%s2 + $0xf0] sm:$0xff]
      %v226 = vld [vmem:[%s2 + $0xf8] sm:$0xff]
      %v227 = vld [vmem:[%s2 + $0x100] sm:$0xff]
      %v228 = vld [vmem:[%s2 + $0x108] sm:$0xff]
      %v229 = vld [vmem:[%s2 + $0x110] sm:$0xff]
      %v230 = vld [vmem:[%s2 + $0x118] sm:$0xff]
      %v231 = vld [vmem:[%s2 + $0x120] sm:$0xff]
      %v232 = vld [vmem:[%s2 + $0x128] sm:$0xff]
      %v233 = vld [vmem:[%s2 + $0x130] sm:$0xff]
      %v234 = vld [vmem:[%s2 + $0x138] sm:$0xff]
      %v235 = vld [vmem:[%s2 + $0x140] sm:$0xff]
      %v236 = vld [vmem:[%s2 + $0x148] sm:$0xff]
      %v237 = vld [vmem:[%s2 + $0x150] sm:$0xff]
      %v238 = vld [vmem:[%s2 + $0x158] sm:$0xff]
      %v239 = vld [vmem:[%s2 + $0x160] sm:$0xff]
      %v240 = vld [vmem:[%s2 + $0x168] sm:$0xff]
      %v241 = vld [vmem:[%s2 + $0x170] sm:$0xff]
      %v242 = vld [vmem:[%s2 + $0x178] sm:$0xff]
      %v243 = vsub.f32 %v189, %v192
      %v244 = vsub.f32 %v190, %v193
      %v245 = vsub.f32 %v191, %v194
      %v246 = vand.u32 2147483647, %v243
      %v247 = vand.u32 2147483647, %v244
      %v248 = vand.u32 2147483647, %v245
      %v249 = vand.u32 2147483647, %v189
      %v250 = vand.u32 2147483647, %v190
      %v251 = vand.u32 2147483647, %v191
      %v252 = vadd.f32 %v249, 1e-12
      %v253 = vadd.f32 %v250, 1e-12
      %v254 = vadd.f32 %v251, 1e-12
      %v255 = vlog2.pop %v252
      %v256 = vmul.f32 %v255, 0.6931472
      %v257 = vlog2.pop %v253
      %v258 = vmul.f32 %v257, 0.6931472
      %v259 = vlog2.pop %v254
      %v260 = vmul.f32 %v259, 0.6931472
      %v261 = vmul.f32 %v256, 0.8
      %v262 = vmul.f32 %v258, 0.8
      %v263 = vmul.f32 %v260, 0.8
      %v264 = vmul.f32 %v261, 1.442695
      %v265 = vpow.pop %v264
      %v266 = vmul.f32 %v262, 1.442695
      %v267 = vpow.pop %v266
      %v268 = vmul.f32 %v263, 1.442695
      %v269 = vpow.pop %v268
      %v270 = vmul.f32 %v192, %v192
      %v271 = vmul.f32 %v193, %v193
      %v272 = vmul.f32 %v194, %v194
      %v273 = vmul.f32 %v270, -50.0
      %v274 = vmul.f32 %v271, -50.0
      %v275 = vmul.f32 %v272, -50.0
      %v276 = vmul.f32 %v273, 1.442695
      %v277 = vpow.pop %v276
      %v278 = vmul.f32 %v274, 1.442695
      %v279 = vpow.pop %v278
      %v280 = vmul.f32 %v275, 1.442695
      %v281 = vpow.pop %v280
      %v282 = vmul.f32 %v189, %v189
      %v283 = vmul.f32 %v190, %v190
      %v284 = vmul.f32 %v191, %v191
      %v285 = vmul.f32 %v282, -50.0
      %v286 = vmul.f32 %v283, -50.0
      %v287 = vmul.f32 %v284, -50.0
      %v288 = vmul.f32 %v285, 1.442695
      %v289 = vpow.pop %v288
      %v290 = vmul.f32 %v286, 1.442695
      %v291 = vpow.pop %v290
      %v292 = vmul.f32 %v287, 1.442695
      %v293 = vpow.pop %v292
      %v294 = vsub.f32 %v277, %v289
      %v295 = vsub.f32 %v279, %v291
      %v296 = vsub.f32 %v281, %v293
      %297 = vmatprep.subr.mxu0 0.0
      %298 = vmatpush1.msra.mxu0 %v195
      %299 = vmatprep.subr.mxu0 0.0
      %300 = vmatpush1.msra.mxu0 %v196
      %301 = vmatprep.subr.mxu0 0.0
      %302 = vmatpush1.msra.mxu0 %v197
      %303 = vmatprep.subr.mxu0 0.0
      %304 = vmatpush1.msra.mxu0 %v198
      %305 = vmatprep.subr.mxu0 0.0
      %306 = vmatpush1.msra.mxu0 %v199
      %307 = vmatprep.subr.mxu0 0.0
      %308 = vmatpush1.msra.mxu0 %v200
      %309 = vmatprep.subr.mxu0 0.0
      %310 = vmatpush1.msra.mxu0 %v201
      %311 = vmatprep.subr.mxu0 0.0
      %312 = vmatpush1.msra.mxu0 %v202
      %313 = vmatprep.subr.mxu0 0.0
      %314 = vmatpush1.msra.mxu0 %v203
      %315 = vmatprep.subr.mxu0 0.0
      %316 = vmatpush1.msra.mxu0 %v204
      %317 = vmatprep.subr.mxu0 0.0
      %318 = vmatpush1.msra.mxu0 %v205
      %319 = vmatprep.subr.mxu0 0.0
      %320 = vmatpush1.msra.mxu0 %v206
      %321 = vmatprep.subr.mxu0 0.0
      %322 = vmatpush1.msra.mxu0 %v207
      %323 = vmatprep.subr.mxu0 0.0
      %324 = vmatpush1.msra.mxu0 %v208
      %325 = vmatprep.subr.mxu0 0.0
      %326 = vmatpush1.msra.mxu0 %v209
      %327 = vmatprep.subr.mxu0 0.0
      %328 = vmatpush1.msra.mxu0 %v210
      %329 = vmatprep.subr.mxu0 0.0
      %330 = vmatpush1.msra.mxu0 %v211
      %331 = vmatprep.subr.mxu0 0.0
      %332 = vmatpush1.msra.mxu0 %v212
      %333 = vmatprep.subr.mxu0 0.0
      %334 = vmatpush1.msra.mxu0 %v213
      %335 = vmatprep.subr.mxu0 0.0
      %336 = vmatpush1.msra.mxu0 %v214
      %337 = vmatprep.subr.mxu0 0.0
      %338 = vmatpush1.msra.mxu0 %v215
      %339 = vmatprep.subr.mxu0 0.0
      %340 = vmatpush1.msra.mxu0 %v216
      %341 = vmatprep.subr.mxu0 0.0
      %342 = vmatpush1.msra.mxu0 %v217
      %343 = vmatprep.subr.mxu0 0.0
      %344 = vmatpush1.msra.mxu0 %v218
      %345 = vmatprep.subr.mxu0 0.0
      %346 = vmatpush1.msra.mxu0 %v219
      %347 = vmatprep.subr.mxu0 0.0
      %348 = vmatpush1.msra.mxu0 %v220
      %349 = vmatprep.subr.mxu0 0.0
      %350 = vmatpush1.msra.mxu0 %v221
      %351 = vmatprep.subr.mxu0 0.0
      %352 = vmatpush1.msra.mxu0 %v222
      %353 = vmatprep.subr.mxu0 0.0
      %354 = vmatpush1.msra.mxu0 %v223
      %355 = vmatprep.subr.mxu0 0.0
      %356 = vmatpush1.msra.mxu0 %v224
      %357 = vmatprep.subr.mxu0 0.0
      %358 = vmatpush1.msra.mxu0 %v225
      %359 = vmatprep.subr.mxu0 0.0
      %360 = vmatpush1.msra.mxu0 %v226
      %361 = vmatprep.mubr.f32.mxu0 %v247
      %362 = vmatmul.mubr.f32.gmra.mrb[0].mxu0 %v246
      %v363 = vpop.f32.mrb[0].mxu0
      %v364 = vadd.f32 0.0, %v363
      %v365 = vpop.f32.mrb[0].mxu0
      %366 = vdwg.mxu0
      %367 = vmatprep.subr.mxu0 0.0
      %368 = vmatpush1.msra.mxu0 %v227
      %369 = vmatprep.subr.mxu0 0.0
      %370 = vmatpush1.msra.mxu0 %v228
      %371 = vmatprep.subr.mxu0 0.0
      %372 = vmatpush1.msra.mxu0 %v229
      %373 = vmatprep.subr.mxu0 0.0
      %374 = vmatpush1.msra.mxu0 %v230
      %375 = vmatprep.subr.mxu0 0.0
      %376 = vmatpush1.msra.mxu0 %v231
      %377 = vmatprep.subr.mxu0 0.0
      %378 = vmatpush1.msra.mxu0 %v232
      %379 = vmatprep.subr.mxu0 0.0
      %380 = vmatpush1.msra.mxu0 %v233
      %381 = vmatprep.subr.mxu0 0.0
      %382 = vmatpush1.msra.mxu0 %v234
      %383 = vmatprep.subr.mxu0 0.0
      %384 = vmatpush1.msra.mxu0 %v235
      %385 = vmatprep.subr.mxu0 0.0
      %386 = vmatpush1.msra.mxu0 %v236
      %387 = vmatprep.subr.mxu0 0.0
      %388 = vmatpush1.msra.mxu0 %v237
      %389 = vmatprep.subr.mxu0 0.0
      %390 = vmatpush1.msra.mxu0 %v238
      %391 = vmatprep.subr.mxu0 0.0
      %392 = vmatpush1.msra.mxu0 %v239
      %393 = vmatprep.subr.mxu0 0.0
      %394 = vmatpush1.msra.mxu0 %v240
      %395 = vmatprep.subr.mxu0 0.0
      %396 = vmatpush1.msra.mxu0 %v241
      %397 = vmatprep.subr.mxu0 0.0
      %398 = vmatpush1.msra.mxu0 %v242
      %399 = vmatprep.subr.mxu0 0.0
      %400 = vmatpush1.msra.mxu0 0.0
      %401 = vmatprep.subr.mxu0 0.0
      %402 = vmatpush1.msra.mxu0 0.0
      %403 = vmatprep.subr.mxu0 0.0
      %404 = vmatpush1.msra.mxu0 0.0
      %405 = vmatprep.subr.mxu0 0.0
      %406 = vmatpush1.msra.mxu0 0.0
      %407 = vmatprep.subr.mxu0 0.0
      %408 = vmatpush1.msra.mxu0 0.0
      %409 = vmatprep.subr.mxu0 0.0
      %410 = vmatpush1.msra.mxu0 0.0
      %411 = vmatprep.subr.mxu0 0.0
      %412 = vmatpush1.msra.mxu0 0.0
      %413 = vmatprep.subr.mxu0 0.0
      %414 = vmatpush1.msra.mxu0 0.0
      %415 = vmatprep.subr.mxu0 0.0
      %416 = vmatpush1.msra.mxu0 0.0
      %417 = vmatprep.subr.mxu0 0.0
      %418 = vmatpush1.msra.mxu0 0.0
      %419 = vmatprep.subr.mxu0 0.0
      %420 = vmatpush1.msra.mxu0 0.0
      %421 = vmatprep.subr.mxu0 0.0
      %422 = vmatpush1.msra.mxu0 0.0
      %423 = vmatprep.subr.mxu0 0.0
      %424 = vmatpush1.msra.mxu0 0.0
      %425 = vmatprep.subr.mxu0 0.0
      %426 = vmatpush1.msra.mxu0 0.0
      %427 = vmatprep.subr.mxu0 0.0
      %428 = vmatpush1.msra.mxu0 0.0
      %429 = vmatprep.subr.mxu0 0.0
      %430 = vmatpush1.msra.mxu0 0.0
      %431 = vmatprep.mubr.f32.mxu0 0.0
      %432 = vmatmul.mubr.f32.gmra.mrb[0].mxu0 %v248
      %v433 = vpop.f32.mrb[0].mxu0
      %v434 = vadd.f32 %v364, %v433
      %v435 = vpop.f32.mrb[0].mxu0
      %436 = vdwg.mxu0
      %437 = vmatprep.subr.mxu0 0.0
      %438 = vmatpush1.msra.mxu0 %v195
      %439 = vmatprep.subr.mxu0 0.0
      %440 = vmatpush1.msra.mxu0 %v196
      %441 = vmatprep.subr.mxu0 0.0
      %442 = vmatpush1.msra.mxu0 %v197
      %443 = vmatprep.subr.mxu0 0.0
      %444 = vmatpush1.msra.mxu0 %v198
      %445 = vmatprep.subr.mxu0 0.0
      %446 = vmatpush1.msra.mxu0 %v199
      %447 = vmatprep.subr.mxu0 0.0
      %448 = vmatpush1.msra.mxu0 %v200
      %449 = vmatprep.subr.mxu0 0.0
      %450 = vmatpush1.msra.mxu0 %v201
      %451 = vmatprep.subr.mxu0 0.0
      %452 = vmatpush1.msra.mxu0 %v202
      %453 = vmatprep.subr.mxu0 0.0
      %454 = vmatpush1.msra.mxu0 %v203
      %455 = vmatprep.subr.mxu0 0.0
      %456 = vmatpush1.msra.mxu0 %v204
      %457 = vmatprep.subr.mxu0 0.0
      %458 = vmatpush1.msra.mxu0 %v205
      %459 = vmatprep.subr.mxu0 0.0
      %460 = vmatpush1.msra.mxu0 %v206
      %461 = vmatprep.subr.mxu0 0.0
      %462 = vmatpush1.msra.mxu0 %v207
      %463 = vmatprep.subr.mxu0 0.0
      %464 = vmatpush1.msra.mxu0 %v208
      %465 = vmatprep.subr.mxu0 0.0
      %466 = vmatpush1.msra.mxu0 %v209
      %467 = vmatprep.subr.mxu0 0.0
      %468 = vmatpush1.msra.mxu0 %v210
      %469 = vmatprep.subr.mxu0 0.0
      %470 = vmatpush1.msra.mxu0 %v211
      %471 = vmatprep.subr.mxu0 0.0
      %472 = vmatpush1.msra.mxu0 %v212
      %473 = vmatprep.subr.mxu0 0.0
      %474 = vmatpush1.msra.mxu0 %v213
      %475 = vmatprep.subr.mxu0 0.0
      %476 = vmatpush1.msra.mxu0 %v214
      %477 = vmatprep.subr.mxu0 0.0
      %478 = vmatpush1.msra.mxu0 %v215
      %479 = vmatprep.subr.mxu0 0.0
      %480 = vmatpush1.msra.mxu0 %v216
      %481 = vmatprep.subr.mxu0 0.0
      %482 = vmatpush1.msra.mxu0 %v217
      %483 = vmatprep.subr.mxu0 0.0
      %484 = vmatpush1.msra.mxu0 %v218
      %485 = vmatprep.subr.mxu0 0.0
      %486 = vmatpush1.msra.mxu0 %v219
      %487 = vmatprep.subr.mxu0 0.0
      %488 = vmatpush1.msra.mxu0 %v220
      %489 = vmatprep.subr.mxu0 0.0
      %490 = vmatpush1.msra.mxu0 %v221
      %491 = vmatprep.subr.mxu0 0.0
      %492 = vmatpush1.msra.mxu0 %v222
      %493 = vmatprep.subr.mxu0 0.0
      %494 = vmatpush1.msra.mxu0 %v223
      %495 = vmatprep.subr.mxu0 0.0
      %496 = vmatpush1.msra.mxu0 %v224
      %497 = vmatprep.subr.mxu0 0.0
      %498 = vmatpush1.msra.mxu0 %v225
      %499 = vmatprep.subr.mxu0 0.0
      %500 = vmatpush1.msra.mxu0 %v226
      %501 = vmatprep.mubr.f32.mxu0 %v267
      %502 = vmatmul.mubr.f32.gmra.mrb[0].mxu0 %v265
      %v503 = vpop.f32.mrb[0].mxu0
      %v504 = vadd.f32 0.0, %v503
      %v505 = vpop.f32.mrb[0].mxu0
      %506 = vdwg.mxu0
      %507 = vmatprep.subr.mxu0 0.0
      %508 = vmatpush1.msra.mxu0 %v227
      %509 = vmatprep.subr.mxu0 0.0
      %510 = vmatpush1.msra.mxu0 %v228
      %511 = vmatprep.subr.mxu0 0.0
      %512 = vmatpush1.msra.mxu0 %v229
      %513 = vmatprep.subr.mxu0 0.0
      %514 = vmatpush1.msra.mxu0 %v230
      %515 = vmatprep.subr.mxu0 0.0
      %516 = vmatpush1.msra.mxu0 %v231
      %517 = vmatprep.subr.mxu0 0.0
      %518 = vmatpush1.msra.mxu0 %v232
      %519 = vmatprep.subr.mxu0 0.0
      %520 = vmatpush1.msra.mxu0 %v233
      %521 = vmatprep.subr.mxu0 0.0
      %522 = vmatpush1.msra.mxu0 %v234
      %523 = vmatprep.subr.mxu0 0.0
      %524 = vmatpush1.msra.mxu0 %v235
      %525 = vmatprep.subr.mxu0 0.0
      %526 = vmatpush1.msra.mxu0 %v236
      %527 = vmatprep.subr.mxu0 0.0
      %528 = vmatpush1.msra.mxu0 %v237
      %529 = vmatprep.subr.mxu0 0.0
      %530 = vmatpush1.msra.mxu0 %v238
      %531 = vmatprep.subr.mxu0 0.0
      %532 = vmatpush1.msra.mxu0 %v239
      %533 = vmatprep.subr.mxu0 0.0
      %534 = vmatpush1.msra.mxu0 %v240
      %535 = vmatprep.subr.mxu0 0.0
      %536 = vmatpush1.msra.mxu0 %v241
      %537 = vmatprep.subr.mxu0 0.0
      %538 = vmatpush1.msra.mxu0 %v242
      %539 = vmatprep.subr.mxu0 0.0
      %540 = vmatpush1.msra.mxu0 0.0
      %541 = vmatprep.subr.mxu0 0.0
      %542 = vmatpush1.msra.mxu0 0.0
      %543 = vmatprep.subr.mxu0 0.0
      %544 = vmatpush1.msra.mxu0 0.0
      %545 = vmatprep.subr.mxu0 0.0
      %546 = vmatpush1.msra.mxu0 0.0
      %547 = vmatprep.subr.mxu0 0.0
      %548 = vmatpush1.msra.mxu0 0.0
      %549 = vmatprep.subr.mxu0 0.0
      %550 = vmatpush1.msra.mxu0 0.0
      %551 = vmatprep.subr.mxu0 0.0
      %552 = vmatpush1.msra.mxu0 0.0
      %553 = vmatprep.subr.mxu0 0.0
      %554 = vmatpush1.msra.mxu0 0.0
      %555 = vmatprep.subr.mxu0 0.0
      %556 = vmatpush1.msra.mxu0 0.0
      %557 = vmatprep.subr.mxu0 0.0
      %558 = vmatpush1.msra.mxu0 0.0
      %559 = vmatprep.subr.mxu0 0.0
      %560 = vmatpush1.msra.mxu0 0.0
      %561 = vmatprep.subr.mxu0 0.0
      %562 = vmatpush1.msra.mxu0 0.0
      %563 = vmatprep.subr.mxu0 0.0
      %564 = vmatpush1.msra.mxu0 0.0
      %565 = vmatprep.subr.mxu0 0.0
      %566 = vmatpush1.msra.mxu0 0.0
      %567 = vmatprep.subr.mxu0 0.0
      %568 = vmatpush1.msra.mxu0 0.0
      %569 = vmatprep.subr.mxu0 0.0
      %570 = vmatpush1.msra.mxu0 0.0
      %571 = vmatprep.mubr.f32.mxu0 0.0
      %572 = vmatmul.mubr.f32.gmra.mrb[0].mxu0 %v269
      %v573 = vpop.f32.mrb[0].mxu0
      %v574 = vadd.f32 %v504, %v573
      %v575 = vpop.f32.mrb[0].mxu0
      %576 = vdwg.mxu0
      %577 = vmatprep.subr.mxu0 0.0
      %578 = vmatpush1.msra.mxu0 %v195
      %579 = vmatprep.subr.mxu0 0.0
      %580 = vmatpush1.msra.mxu0 %v196
      %581 = vmatprep.subr.mxu0 0.0
      %582 = vmatpush1.msra.mxu0 %v197
      %583 = vmatprep.subr.mxu0 0.0
      %584 = vmatpush1.msra.mxu0 %v198
      %585 = vmatprep.subr.mxu0 0.0
      %586 = vmatpush1.msra.mxu0 %v199
      %587 = vmatprep.subr.mxu0 0.0
      %588 = vmatpush1.msra.mxu0 %v200
      %589 = vmatprep.subr.mxu0 0.0
      %590 = vmatpush1.msra.mxu0 %v201
      %591 = vmatprep.subr.mxu0 0.0
      %592 = vmatpush1.msra.mxu0 %v202
      %593 = vmatprep.subr.mxu0 0.0
      %594 = vmatpush1.msra.mxu0 %v203
      %595 = vmatprep.subr.mxu0 0.0
      %596 = vmatpush1.msra.mxu0 %v204
      %597 = vmatprep.subr.mxu0 0.0
      %598 = vmatpush1.msra.mxu0 %v205
      %599 = vmatprep.subr.mxu0 0.0
      %600 = vmatpush1.msra.mxu0 %v206
      %601 = vmatprep.subr.mxu0 0.0
      %602 = vmatpush1.msra.mxu0 %v207
      %603 = vmatprep.subr.mxu0 0.0
      %604 = vmatpush1.msra.mxu0 %v208
      %605 = vmatprep.subr.mxu0 0.0
      %606 = vmatpush1.msra.mxu0 %v209
      %607 = vmatprep.subr.mxu0 0.0
      %608 = vmatpush1.msra.mxu0 %v210
      %609 = vmatprep.subr.mxu0 0.0
      %610 = vmatpush1.msra.mxu0 %v211
      %611 = vmatprep.subr.mxu0 0.0
      %612 = vmatpush1.msra.mxu0 %v212
      %613 = vmatprep.subr.mxu0 0.0
      %614 = vmatpush1.msra.mxu0 %v213
      %615 = vmatprep.subr.mxu0 0.0
      %616 = vmatpush1.msra.mxu0 %v214
      %617 = vmatprep.subr.mxu0 0.0
      %618 = vmatpush1.msra.mxu0 %v215
      %619 = vmatprep.subr.mxu0 0.0
      %620 = vmatpush1.msra.mxu0 %v216
      %621 = vmatprep.subr.mxu0 0.0
      %622 = vmatpush1.msra.mxu0 %v217
      %623 = vmatprep.subr.mxu0 0.0
      %624 = vmatpush1.msra.mxu0 %v218
      %625 = vmatprep.subr.mxu0 0.0
      %626 = vmatpush1.msra.mxu0 %v219
      %627 = vmatprep.subr.mxu0 0.0
      %628 = vmatpush1.msra.mxu0 %v220
      %629 = vmatprep.subr.mxu0 0.0
      %630 = vmatpush1.msra.mxu0 %v221
      %631 = vmatprep.subr.mxu0 0.0
      %632 = vmatpush1.msra.mxu0 %v222
      %633 = vmatprep.subr.mxu0 0.0
      %634 = vmatpush1.msra.mxu0 %v223
      %635 = vmatprep.subr.mxu0 0.0
      %636 = vmatpush1.msra.mxu0 %v224
      %637 = vmatprep.subr.mxu0 0.0
      %638 = vmatpush1.msra.mxu0 %v225
      %639 = vmatprep.subr.mxu0 0.0
      %640 = vmatpush1.msra.mxu0 %v226
      %641 = vmatprep.mubr.f32.mxu0 %v190
      %642 = vmatmul.mubr.f32.gmra.mrb[0].mxu0 %v189
      %v643 = vpop.f32.mrb[0].mxu0
      %v644 = vadd.f32 0.0, %v643
      %v645 = vpop.f32.mrb[0].mxu0
      %646 = vdwg.mxu0
      %647 = vmatprep.subr.mxu0 0.0
      %648 = vmatpush1.msra.mxu0 %v227
      %649 = vmatprep.subr.mxu0 0.0
      %650 = vmatpush1.msra.mxu0 %v228
      %651 = vmatprep.subr.mxu0 0.0
      %652 = vmatpush1.msra.mxu0 %v229
      %653 = vmatprep.subr.mxu0 0.0
      %654 = vmatpush1.msra.mxu0 %v230
      %655 = vmatprep.subr.mxu0 0.0
      %656 = vmatpush1.msra.mxu0 %v231
      %657 = vmatprep.subr.mxu0 0.0
      %658 = vmatpush1.msra.mxu0 %v232
      %659 = vmatprep.subr.mxu0 0.0
      %660 = vmatpush1.msra.mxu0 %v233
      %661 = vmatprep.subr.mxu0 0.0
      %662 = vmatpush1.msra.mxu0 %v234
      %663 = vmatprep.subr.mxu0 0.0
      %664 = vmatpush1.msra.mxu0 %v235
      %665 = vmatprep.subr.mxu0 0.0
      %666 = vmatpush1.msra.mxu0 %v236
      %667 = vmatprep.subr.mxu0 0.0
      %668 = vmatpush1.msra.mxu0 %v237
      %669 = vmatprep.subr.mxu0 0.0
      %670 = vmatpush1.msra.mxu0 %v238
      %671 = vmatprep.subr.mxu0 0.0
      %672 = vmatpush1.msra.mxu0 %v239
      %673 = vmatprep.subr.mxu0 0.0
      %674 = vmatpush1.msra.mxu0 %v240
      %675 = vmatprep.subr.mxu0 0.0
      %676 = vmatpush1.msra.mxu0 %v241
      %677 = vmatprep.subr.mxu0 0.0
      %678 = vmatpush1.msra.mxu0 %v242
      %679 = vmatprep.subr.mxu0 0.0
      %680 = vmatpush1.msra.mxu0 0.0
      %681 = vmatprep.subr.mxu0 0.0
      %682 = vmatpush1.msra.mxu0 0.0
      %683 = vmatprep.subr.mxu0 0.0
      %684 = vmatpush1.msra.mxu0 0.0
      %685 = vmatprep.subr.mxu0 0.0
      %686 = vmatpush1.msra.mxu0 0.0
      %687 = vmatprep.subr.mxu0 0.0
      %688 = vmatpush1.msra.mxu0 0.0
      %689 = vmatprep.subr.mxu0 0.0
      %690 = vmatpush1.msra.mxu0 0.0
      %691 = vmatprep.subr.mxu0 0.0
      %692 = vmatpush1.msra.mxu0 0.0
      %693 = vmatprep.subr.mxu0 0.0
      %694 = vmatpush1.msra.mxu0 0.0
      %695 = vmatprep.subr.mxu0 0.0
      %696 = vmatpush1.msra.mxu0 0.0
      %697 = vmatprep.subr.mxu0 0.0
      %698 = vmatpush1.msra.mxu0 0.0
      %699 = vmatprep.subr.mxu0 0.0
      %700 = vmatpush1.msra.mxu0 0.0
      %701 = vmatprep.subr.mxu0 0.0
      %702 = vmatpush1.msra.mxu0 0.0
      %703 = vmatprep.subr.mxu0 0.0
      %704 = vmatpush1.msra.mxu0 0.0
      %705 = vmatprep.subr.mxu0 0.0
      %706 = vmatpush1.msra.mxu0 0.0
      %707 = vmatprep.subr.mxu0 0.0
      %708 = vmatpush1.msra.mxu0 0.0
      %709 = vmatprep.subr.mxu0 0.0
      %710 = vmatpush1.msra.mxu0 0.0
      %711 = vmatprep.mubr.f32.mxu0 0.0
      %712 = vmatmul.mubr.f32.gmra.mrb[0].mxu0 %v191
      %v713 = vpop.f32.mrb[0].mxu0
      %v714 = vadd.f32 %v644, %v713
      %v715 = vpop.f32.mrb[0].mxu0
      %716 = vdwg.mxu0
      %v717 = vsub.f32 1.0, %v714
      %v718 = vand.u32 2147483647, %v717
      %719 = vmatprep.subr.mxu0 0.0
      %720 = vmatpush1.msra.mxu0 %v195
      %721 = vmatprep.subr.mxu0 0.0
      %722 = vmatpush1.msra.mxu0 %v196
      %723 = vmatprep.subr.mxu0 0.0
      %724 = vmatpush1.msra.mxu0 %v197
      %725 = vmatprep.subr.mxu0 0.0
      %726 = vmatpush1.msra.mxu0 %v198
      %727 = vmatprep.subr.mxu0 0.0
      %728 = vmatpush1.msra.mxu0 %v199
      %729 = vmatprep.subr.mxu0 0.0
      %730 = vmatpush1.msra.mxu0 %v200
      %731 = vmatprep.subr.mxu0 0.0
      %732 = vmatpush1.msra.mxu0 %v201
      %733 = vmatprep.subr.mxu0 0.0
      %734 = vmatpush1.msra.mxu0 %v202
      %735 = vmatprep.subr.mxu0 0.0
      %736 = vmatpush1.msra.mxu0 %v203
      %737 = vmatprep.subr.mxu0 0.0
      %738 = vmatpush1.msra.mxu0 %v204
      %739 = vmatprep.subr.mxu0 0.0
      %740 = vmatpush1.msra.mxu0 %v205
      %741 = vmatprep.subr.mxu0 0.0
      %742 = vmatpush1.msra.mxu0 %v206
      %743 = vmatprep.subr.mxu0 0.0
      %744 = vmatpush1.msra.mxu0 %v207
      %745 = vmatprep.subr.mxu0 0.0
      %746 = vmatpush1.msra.mxu0 %v208
      %747 = vmatprep.subr.mxu0 0.0
      %748 = vmatpush1.msra.mxu0 %v209
      %749 = vmatprep.subr.mxu0 0.0
      %750 = vmatpush1.msra.mxu0 %v210
      %751 = vmatprep.subr.mxu0 0.0
      %752 = vmatpush1.msra.mxu0 %v211
      %753 = vmatprep.subr.mxu0 0.0
      %754 = vmatpush1.msra.mxu0 %v212
      %755 = vmatprep.subr.mxu0 0.0
      %756 = vmatpush1.msra.mxu0 %v213
      %757 = vmatprep.subr.mxu0 0.0
      %758 = vmatpush1.msra.mxu0 %v214
      %759 = vmatprep.subr.mxu0 0.0
      %760 = vmatpush1.msra.mxu0 %v215
      %761 = vmatprep.subr.mxu0 0.0
      %762 = vmatpush1.msra.mxu0 %v216
      %763 = vmatprep.subr.mxu0 0.0
      %764 = vmatpush1.msra.mxu0 %v217
      %765 = vmatprep.subr.mxu0 0.0
      %766 = vmatpush1.msra.mxu0 %v218
      %767 = vmatprep.subr.mxu0 0.0
      %768 = vmatpush1.msra.mxu0 %v219
      %769 = vmatprep.subr.mxu0 0.0
      %770 = vmatpush1.msra.mxu0 %v220
      %771 = vmatprep.subr.mxu0 0.0
      %772 = vmatpush1.msra.mxu0 %v221
      %773 = vmatprep.subr.mxu0 0.0
      %774 = vmatpush1.msra.mxu0 %v222
      %775 = vmatprep.subr.mxu0 0.0
      %776 = vmatpush1.msra.mxu0 %v223
      %777 = vmatprep.subr.mxu0 0.0
      %778 = vmatpush1.msra.mxu0 %v224
      %779 = vmatprep.subr.mxu0 0.0
      %780 = vmatpush1.msra.mxu0 %v225
      %781 = vmatprep.subr.mxu0 0.0
      %782 = vmatpush1.msra.mxu0 %v226
      %783 = vmatprep.mubr.f32.mxu0 %v295
      %784 = vmatmul.mubr.f32.gmra.mrb[0].mxu0 %v294
      %v785 = vpop.f32.mrb[0].mxu0
      %v786 = vadd.f32 0.0, %v785
      %v787 = vpop.f32.mrb[0].mxu0
      %788 = vdwg.mxu0
      %789 = vmatprep.subr.mxu0 0.0
      %790 = vmatpush1.msra.mxu0 %v227
      %791 = vmatprep.subr.mxu0 0.0
      %792 = vmatpush1.msra.mxu0 %v228
      %793 = vmatprep.subr.mxu0 0.0
      %794 = vmatpush1.msra.mxu0 %v229
      %795 = vmatprep.subr.mxu0 0.0
      %796 = vmatpush1.msra.mxu0 %v230
      %797 = vmatprep.subr.mxu0 0.0
      %798 = vmatpush1.msra.mxu0 %v231
      %799 = vmatprep.subr.mxu0 0.0
      %800 = vmatpush1.msra.mxu0 %v232
      %801 = vmatprep.subr.mxu0 0.0
      %802 = vmatpush1.msra.mxu0 %v233
      %803 = vmatprep.subr.mxu0 0.0
      %804 = vmatpush1.msra.mxu0 %v234
      %805 = vmatprep.subr.mxu0 0.0
      %806 = vmatpush1.msra.mxu0 %v235
      %807 = vmatprep.subr.mxu0 0.0
      %808 = vmatpush1.msra.mxu0 %v236
      %809 = vmatprep.subr.mxu0 0.0
      %810 = vmatpush1.msra.mxu0 %v237
      %811 = vmatprep.subr.mxu0 0.0
      %812 = vmatpush1.msra.mxu0 %v238
      %813 = vmatprep.subr.mxu0 0.0
      %814 = vmatpush1.msra.mxu0 %v239
      %815 = vmatprep.subr.mxu0 0.0
      %816 = vmatpush1.msra.mxu0 %v240
      %817 = vmatprep.subr.mxu0 0.0
      %818 = vmatpush1.msra.mxu0 %v241
      %819 = vmatprep.subr.mxu0 0.0
      %820 = vmatpush1.msra.mxu0 %v242
      %821 = vmatprep.subr.mxu0 0.0
      %822 = vmatpush1.msra.mxu0 0.0
      %823 = vmatprep.subr.mxu0 0.0
      %824 = vmatpush1.msra.mxu0 0.0
      %825 = vmatprep.subr.mxu0 0.0
      %826 = vmatpush1.msra.mxu0 0.0
      %827 = vmatprep.subr.mxu0 0.0
      %828 = vmatpush1.msra.mxu0 0.0
      %829 = vmatprep.subr.mxu0 0.0
      %830 = vmatpush1.msra.mxu0 0.0
      %831 = vmatprep.subr.mxu0 0.0
      %832 = vmatpush1.msra.mxu0 0.0
      %833 = vmatprep.subr.mxu0 0.0
      %834 = vmatpush1.msra.mxu0 0.0
      %835 = vmatprep.subr.mxu0 0.0
      %836 = vmatpush1.msra.mxu0 0.0
      %837 = vmatprep.subr.mxu0 0.0
      %838 = vmatpush1.msra.mxu0 0.0
      %839 = vmatprep.subr.mxu0 0.0
      %840 = vmatpush1.msra.mxu0 0.0
      %841 = vmatprep.subr.mxu0 0.0
      %842 = vmatpush1.msra.mxu0 0.0
      %843 = vmatprep.subr.mxu0 0.0
      %844 = vmatpush1.msra.mxu0 0.0
      %845 = vmatprep.subr.mxu0 0.0
      %846 = vmatpush1.msra.mxu0 0.0
      %847 = vmatprep.subr.mxu0 0.0
      %848 = vmatpush1.msra.mxu0 0.0
      %849 = vmatprep.subr.mxu0 0.0
      %850 = vmatpush1.msra.mxu0 0.0
      %851 = vmatprep.subr.mxu0 0.0
      %852 = vmatpush1.msra.mxu0 0.0
      %853 = vmatprep.mubr.f32.mxu0 0.0
      %854 = vmatmul.mubr.f32.gmra.mrb[0].mxu0 %v296
      %v855 = vpop.f32.mrb[0].mxu0
      %v856 = vadd.f32 %v786, %v855
      %v857 = vpop.f32.mrb[0].mxu0
      %858 = vdwg.mxu0
      %v859 = vand.u32 2147483647, %v856
      %s860 = smul.u32 %s14, 128
      %v861 = vlaneseq
      %v862 = vshrl.u32 %v861, 7
      %v863 = vlaneseq
      %v864 = vand.u32 %v863, 127
      %v865 = vmul.u32 %v862, 16
      %v866 = vstv %s860
      %v867 = vadd.s32 %v866, %v865
      %v868 = vadd.s32 %v867, %v864
      %vm869 = vcmp.lt.s32.totalorder %v868, 200
      %v870 = vsel %vm869, 1, 0
      %v871 = vcvt.s32.f32 %v870
      %v872 = vmul.f32 %v434, %v871
      %v873 = vmul.f32 %v574, %v871
      %v874 = vmul.f32 %v718, %v871
      %v875 = vmul.f32 %v859, %v871
      %vm876 = vcmp.eq.s32.totalorder %v862, 0
      %vm877 = vcmask 130048
      %v878 = vsel %vm877, %v872, 0.0
      %879 = vadd.xlane.f32.xlu0 %v878
      %v880 = vpop.xlane.xlu0 %879
      %v881 = vrot.slane %v880, 4
      %v882 = vadd.f32 %v880, %v881
      %v883 = vrot.slane %v882, 2
      %v884 = vadd.f32 %v882, %v883
      %v885 = vrot.slane %v884, 1
      %v886 = vadd.f32 %v884, %v885
      %s887 = vtos %v886
      %vm888 = vcmp.eq.s32.totalorder %v862, 1
      %v889 = vsel %vm877, %v873, 0.0
      %890 = vadd.xlane.f32.xlu0 %v889
      %v891 = vpop.xlane.xlu0 %890
      %v892 = vrot.slane %v891, 4
      %v893 = vadd.f32 %v891, %v892
      %v894 = vrot.slane %v893, 2
      %v895 = vadd.f32 %v893, %v894
      %v896 = vrot.slane %v895, 1
      %v897 = vadd.f32 %v895, %v896
      %s898 = vtos %v897
      %vm899 = vcmp.eq.s32.totalorder %v862, 2
      %v900 = vsel %vm877, %v874, 0.0
      %901 = vadd.xlane.f32.xlu0 %v900
      %v902 = vpop.xlane.xlu0 %901
      %v903 = vrot.slane %v902, 4
      %v904 = vadd.f32 %v902, %v903
      %v905 = vrot.slane %v904, 2
      %v906 = vadd.f32 %v904, %v905
      %v907 = vrot.slane %v906, 1
      %v908 = vadd.f32 %v906, %v907
      %s909 = vtos %v908
      %vm910 = vcmp.eq.s32.totalorder %v862, 3
      %v911 = vsel %vm877, %v875, 0.0
      %912 = vadd.xlane.f32.xlu0 %v911
      %v913 = vpop.xlane.xlu0 %912
      %v914 = vrot.slane %v913, 4
      %v915 = vadd.f32 %v913, %v914
      %v916 = vrot.slane %v915, 2
      %v917 = vadd.f32 %v915, %v916
      %v918 = vrot.slane %v917, 1
      %v919 = vadd.f32 %v917, %v918
      %s920 = vtos %v919
      %v921 = vstv %s920
      %v922 = vsel %vm910, %v921, 0.0
      %v923 = vstv %s909
      %v924 = vsel %vm899, %v923, %v922
      %v925 = vstv %s898
      %v926 = vsel %vm888, %v925, %v924
      %v927 = vstv %s887
      %v928 = vsel %vm876, %v927, %v926
      %929 = vst [vmem:[%s188] sm:$0xff] %v928
      %p930 = scmp.lt.s32.totalorder %s14, 1
      %s931 = scalar_select %p930, %s14, 1
      %s932 = smul.addr %s931, 8
      %s933 = scalar_lea.vmem %s3, %s932
      // Predicated region
      $region33: #{lbs_loss.1} parent=31 // pred_check
        %p934 = pneg %p105
      $region34: #{lbs_loss.1} parent=31 // pred_check_branch
        %936 = sbr.rel (%p934) target = $region36
      $region35: #{lbs_loss.1} parent=31 // pred_region
        _
      $region36: #{lbs_loss.1} parent=31 // pred_fallthru
        _
    $region32: #{lbs_loss.1} parent=5 // pred_fallthru
      _
    %p937 = scmp.le.s32.totalorder 2, %s9
    // Predicated region
    $region37: #{lbs_loss.1} parent=5 // pred_check
      %p938 = pneg %p937
    $region38: #{lbs_loss.1} parent=5 // pred_check_branch
      %940 = sbr.rel (%p938) target = $region40
    $region39: #{lbs_loss.1} parent=5 // pred_region
      %s941 = ssub.s32 %s9, 2
      // Predicated region
      $region41: #{lbs_loss.1} parent=39 // pred_check
        %p942 = pneg %p111
      $region42: #{lbs_loss.1} parent=39 // pred_check_branch
        %944 = sbr.rel (%p942) target = $region44
      $region43: #{lbs_loss.1} parent=39 // pred_region
        %p945 = scmp.lt.s32.totalorder %s15, 1
        %s946 = scalar_select %p945, %s15, 1
        %s947 = smul.addr %s946, 8
        %s948 = scalar_lea.vmem %s3, %s947
      $region44: #{lbs_loss.1} parent=39 // pred_fallthru
        _
    $region40: #{lbs_loss.1} parent=5 // pred_fallthru
      _
  $region6: #{lbs_loss.1} parent=0 // loop_footer
    %s13 = sadd.s32 1, %s9
  $region7: #{lbs_loss.1} parent=0 // loop_footer_branch
    %8 = sbr.rel target = $region3
  $region8: #{lbs_loss.1} parent=0 // loop_exit
    _

</llo_original>
